<compile_context>
chip_gen: v5e
topology: v5e:2x2
jax: 0.10.0
libtpu: 0.0.40
codegen_flags: <defaults>
</compile_context>

<pallas_src>
import jax
import jax.numpy as jnp
from jax import lax
from jax.experimental import pallas as pl
from jax.experimental.pallas import tpu as pltpu

NEG_SLOPE = 0.2  # Encoder_var default negative_slope
LANE = 128       # TPU lane width


# ----------------------------------------------------------------------------
# Kernel
# ----------------------------------------------------------------------------
def _encoder_var_kernel(x_ref,
                        w1_ref, b1_ref,
                        w2_ref, b2_ref,
                        wh_ref, bh_ref,
                        out_ref):
    # x tile: (TB, F0) in compute dtype (bf16 by default).
    x = x_ref[...]
    cdt = w1_ref.dtype

    # FC Layer 0: linear (BN folded into weights/bias) + LeakyReLU.
    # Bias broadcast (1,F)->(TB,F) happens once per grid step (no inner loop).
    h = jnp.dot(x, w1_ref[...], preferred_element_type=jnp.float32) + b1_ref[...]
    h = jnp.where(h > 0, h, NEG_SLOPE * h)

    # FC Layer 1: linear (BN folded) + LeakyReLU.
    h = jnp.dot(h.astype(cdt), w2_ref[...],
                preferred_element_type=jnp.float32) + b2_ref[...]
    h = jnp.where(h > 0, h, NEG_SLOPE * h)

    # Fused mu|var head: single matmul into a lane-dense padded output slab.
    out = jnp.dot(h.astype(cdt), wh_ref[...],
                  preferred_element_type=jnp.float32) + bh_ref[...]
    out_ref[...] = out.astype(out_ref.dtype)


# ----------------------------------------------------------------------------
# Wrapper
# ----------------------------------------------------------------------------
def encoder_var_forward(x, kp, *, block_b=512):
    """x: [B, F0] float32.  kp: folded kernel params from fold_params()."""
    assert block_b % 8 == 0, "batch tile must be a multiple of 8 sublanes"
    B, F0 = x.shape
    F3 = kp["F3"]
    NH = kp["wh"].shape[1]          # padded (>= 2*F3, multiple of 128)
    cdt = kp["w1"].dtype

    # Pad batch up to a multiple of the batch tile.
    tb = block_b
    Bp = ((B + tb - 1) // tb) * tb
    xk = x.astype(cdt)
    if Bp != B:
        xk = jnp.pad(xk, ((0, Bp - B), (0, 0)))

    grid = (Bp // tb,)

    in_specs = [
        # streamed batch tile of x
        pl.BlockSpec((tb, F0), lambda i: (i, 0)),
        # weights / biases: full arrays, constant index_map -> VMEM-resident
        pl.BlockSpec(kp["w1"].shape, lambda i: (0, 0)),
        pl.BlockSpec(kp["b1"].shape, lambda i: (0, 0)),
        pl.BlockSpec(kp["w2"].shape, lambda i: (0, 0)),
        pl.BlockSpec(kp["b2"].shape, lambda i: (0, 0)),
        pl.BlockSpec(kp["wh"].shape, lambda i: (0, 0)),
        pl.BlockSpec(kp["bh"].shape, lambda i: (0, 0)),
    ]
    out_specs = pl.BlockSpec((tb, NH), lambda i: (i, 0))

    out = pl.pallas_call(
        _encoder_var_kernel,
        out_shape=jax.ShapeDtypeStruct((Bp, NH), jnp.float32),
        grid=grid,
        in_specs=in_specs,
        out_specs=out_specs,
        compiler_params=pltpu.CompilerParams(
            dimension_semantics=("parallel",)),
    )(xk, kp["w1"], kp["b1"], kp["w2"], kp["b2"], kp["wh"], kp["bh"])

    mu = out[:B, :F3]
    var = out[:B, F3:2 * F3]
    return mu, var


# ----------------------------------------------------------------------------
# Parameter construction (PyTorch-style init) and folding
# ----------------------------------------------------------------------------
def make_raw_params(key, features):
    """Deterministic params mimicking nn.Linear default init and a non-trivial
    eval-mode BatchNorm1d (gamma/beta/running stats). Weights stored [in,out]."""
    F0, F1, F2, F3 = features
    eps = 0.001

    def linear(k, fan_in, fan_out):
        kw, kb = jax.random.split(k)
        bound = 1.0 / jnp.sqrt(fan_in)
        w = jax.random.uniform(kw, (fan_in, fan_out), jnp.float32, -bound, bound)
        b = jax.random.uniform(kb, (1, fan_out), jnp.float32, -bound, bound)
        return w, b

    def bn(k, n):
        kg, kb_, km, kv = jax.random.split(k, 4)
        gamma = 1.0 + 0.1 * jax.random.normal(kg, (1, n), jnp.float32)
        beta = 0.1 * jax.random.normal(kb_, (1, n), jnp.float32)
        rmean = 0.1 * jax.random.normal(km, (1, n), jnp.float32)
        rvar = 1.0 + 0.1 * jax.random.uniform(kv, (1, n), jnp.float32)
        return gamma, beta, rmean, rvar

    k1, k2, k3, k4, k5, k6 = jax.random.split(key, 6)
    w1, b1 = linear(k1, F0, F1)
    w2, b2 = linear(k2, F1, F2)
    wmu, bmu = linear(k3, F2, F3)
    wvar, bvar = linear(k4, F2, F3)
    g1, be1, rm1, rv1 = bn(k5, F1)
    g2, be2, rm2, rv2 = bn(k6, F2)
    return dict(w1=w1, b1=b1, g1=g1, be1=be1, rm1=rm1, rv1=rv1,
                w2=w2, b2=b2, g2=g2, be2=be2, rm2=rm2, rv2=rv2,
                wmu=wmu, bmu=bmu, wvar=wvar, bvar=bvar, bn_eps=eps)


def fold_params(raw, compute_dtype=jnp.bfloat16, lane=LANE):
    """Fold eval-mode BN into linear weights/biases, concat+pad the mu|var
    head to a lane multiple, and cast weights/inputs' dtype to compute_dtype.
    Biases stay float32 (epilogue runs on the f32 accumulator)."""
    eps = raw["bn_eps"]

    def bn_fold(gamma, beta, rmean, rvar):
        scale = gamma / jnp.sqrt(rvar + eps)
        shift = beta - rmean * scale
        return scale, shift

    s1, t1 = bn_fold(raw["g1"], raw["be1"], raw["rm1"], raw["rv1"])
    s2, t2 = bn_fold(raw["g2"], raw["be2"], raw["rm2"], raw["rv2"])

    w1 = (raw["w1"] * s1).astype(compute_dtype)            # scale over out axis
    b1 = (raw["b1"] * s1 + t1).astype(jnp.float32)
    w2 = (raw["w2"] * s2).astype(compute_dtype)
    b2 = (raw["b2"] * s2 + t2).astype(jnp.float32)

    F2, F3 = raw["wmu"].shape
    nh = 2 * F3
    nh_pad = ((nh + lane - 1) // lane) * lane
    nh_pad = max(nh_pad, lane)
    wh = jnp.concatenate([raw["wmu"], raw["wvar"]], axis=1)
    bh = jnp.concatenate([raw["bmu"], raw["bvar"]], axis=1)
    wh = jnp.pad(wh, ((0, 0), (0, nh_pad - nh))).astype(compute_dtype)
    bh = jnp.pad(bh, ((0, 0), (0, nh_pad - nh))).astype(jnp.float32)

    return dict(w1=w1, b1=b1, w2=w2, b2=b2, wh=wh, bh=bh, F3=F3)


# ----------------------------------------------------------------------------
# References for verification
# ----------------------------------------------------------------------------
def reference_forward_f32(x, raw):
    """Unfolded, full-f32, eval-mode semantics (matches PyTorch module.eval())."""
    hp = lax.Precision.HIGHEST
    eps = raw["bn_eps"]
    h = jnp.dot(x, raw["w1"], precision=hp) + raw["b1"]
    h = (h - raw["rm1"]) / jnp.sqrt(raw["rv1"] + eps) * raw["g1"] + raw["be1"]
    h = jnp.where(h > 0, h, NEG_SLOPE * h)
    h = jnp.dot(h, raw["w2"], precision=hp) + raw["b2"]
    h = (h - raw["rm2"]) / jnp.sqrt(raw["rv2"] + eps) * raw["g2"] + raw["be2"]
    h = jnp.where(h > 0, h, NEG_SLOPE * h)
    mu = jnp.dot(h, raw["wmu"], precision=hp) + raw["bmu"]
    var = jnp.dot(h, raw["wvar"], precision=hp) + raw["bvar"]
    return mu, var


def reference_forward_mirror(x, kp):
    """Plain-JAX reference with the exact same folded params / dtype policy
    as the kernel (bf16 operands, f32 accumulation + epilogue)."""
    cdt = kp["w1"].dtype
    h = jnp.dot(x.astype(cdt), kp["w1"],
                preferred_element_type=jnp.float32) + kp["b1"]
    h = jnp.where(h > 0, h, NEG_SLOPE * h)
    h = jnp.dot(h.astype(cdt), kp["w2"],
                preferred_element_type=jnp.float32) + kp["b2"]
    h = jnp.where(h > 0, h, NEG_SLOPE * h)
    out = jnp.dot(h.astype(cdt), kp["wh"],
                  preferred_element_type=jnp.float32) + kp["bh"]
    F3 = kp["F3"]
    return out[:, :F3], out[:, F3:2 * F3]


# ----------------------------------------------------------------------------
# Demo / self-test
# ----------------------------------------------------------------------------
if __name__ == "__main__":
    # Small shapes consistent with Encoder_var(features=[F0, F1, F2, F3]).
    features = [32, 16, 16, 8]
    batch = 64            # small; tiled with block_b=16 -> grid of 4 steps

    key = jax.random.PRNGKey(0)
    kx, kparam = jax.random.split(key)
    x = jax.random.normal(kx, (batch, features[0]), jnp.float32)
    raw = make_raw_params(kparam, features)

    kp = fold_params(raw, compute_dtype=jnp.bfloat16)

    mu, var = encoder_var_forward(x, kp, block_b=16)
    mu = jax.block_until_ready(mu)
    var = jax.block_until_ready(var)

    # Tight check: kernel vs mirrored-precision JAX reference (same folded
    # params, same bf16/f32 policy) -> verifies kernel structure & tiling.
    mu_m, var_m = reference_forward_mirror(x, kp)
    assert jnp.allclose(mu, mu_m, atol=1e-3, rtol=1e-3), "mirror mu mismatch"
    assert jnp.allclose(var, var_m, atol=1e-3, rtol=1e-3), "mirror var mismatch"

    # Loose check: kernel (bf16 weights) vs full-f32 unfolded eval-mode
    # reference -> verifies the BN folding and head concatenation.
    mu_f, var_f = reference_forward_f32(x, raw)
    assert jnp.allclose(mu, mu_f, atol=5e-2, rtol=5e-2), "f32 mu mismatch"
    assert jnp.allclose(var, var_f, atol=5e-2, rtol=5e-2), "f32 var mismatch"

    print("KERNEL_OK")
</pallas_src>

<mosaic_0001>
module attributes {stable_mosaic.version = 11 : i64} {
  func.func @_encoder_var_kernel(%arg0: i32, %arg1: memref<16x32xbf16, #tpu.memory_space<vmem>>, %arg2: memref<32x16xbf16, #tpu.memory_space<vmem>>, %arg3: memref<1x16xf32, #tpu.memory_space<vmem>>, %arg4: memref<16x16xbf16, #tpu.memory_space<vmem>>, %arg5: memref<1x16xf32, #tpu.memory_space<vmem>>, %arg6: memref<16x128xbf16, #tpu.memory_space<vmem>>, %arg7: memref<1x128xf32, #tpu.memory_space<vmem>>, %arg8: memref<16x128xf32, #tpu.memory_space<vmem>>) attributes {dimension_semantics = [#tpu.dimension_semantics<parallel>], iteration_bounds = array<i64: 4>, scalar_prefetch = 0 : i64, scratch_operands = 0 : i64, tpu.core_type = #tpu.core_type<tc>, window_params = [{transform_indices = @transform_0, window_bounds = array<i64: 16, 32>}, {pipeline_mode = #tpu.pipeline_mode<synchronous>, transform_indices = @transform_1, window_bounds = array<i64: 32, 16>}, {pipeline_mode = #tpu.pipeline_mode<synchronous>, transform_indices = @transform_2, window_bounds = array<i64: 1, 16>}, {pipeline_mode = #tpu.pipeline_mode<synchronous>, transform_indices = @transform_3, window_bounds = array<i64: 16, 16>}, {pipeline_mode = #tpu.pipeline_mode<synchronous>, transform_indices = @transform_4, window_bounds = array<i64: 1, 16>}, {pipeline_mode = #tpu.pipeline_mode<synchronous>, transform_indices = @transform_5, window_bounds = array<i64: 16, 128>}, {pipeline_mode = #tpu.pipeline_mode<synchronous>, transform_indices = @transform_6, window_bounds = array<i64: 1, 128>}, {transform_indices = @transform_7, window_bounds = array<i64: 16, 128>}]} {
    %c0 = arith.constant 0 : index
    %c0_0 = arith.constant 0 : index
    %0 = vector.load %arg1[%c0, %c0_0] : memref<16x32xbf16, #tpu.memory_space<vmem>>, vector<16x32xbf16>
    %c0_1 = arith.constant 0 : index
    %c0_2 = arith.constant 0 : index
    %1 = vector.load %arg2[%c0_1, %c0_2] : memref<32x16xbf16, #tpu.memory_space<vmem>>, vector<32x16xbf16>
    %cst = arith.constant dense<0.000000e+00> : vector<16x16xf32>
    %2 = tpu.matmul %0, %1, %cst {dimension_numbers = #tpu.dot_dimension_numbers<[1], [0], [0], [1], [0, 0, 1, 1], [], []>} : vector<16x32xbf16>, vector<32x16xbf16>, vector<16x16xf32> -> vector<16x16xf32>
    %c0_3 = arith.constant 0 : index
    %c0_4 = arith.constant 0 : index
    %3 = vector.load %arg3[%c0_3, %c0_4] : memref<1x16xf32, #tpu.memory_space<vmem>>, vector<1x16xf32>
    %4 = vector.broadcast %3 : vector<1x16xf32> to vector<16x16xf32>
    %5 = arith.addf %2, %4 : vector<16x16xf32>
    %cst_5 = arith.constant 0.000000e+00 : f32
    %6 = vector.broadcast %cst_5 : f32 to vector<16x16xf32>
    %7 = arith.cmpf ogt, %5, %6 : vector<16x16xf32>
    %cst_6 = arith.constant 2.000000e-01 : f32
    %8 = vector.broadcast %cst_6 : f32 to vector<16x16xf32>
    %9 = arith.mulf %8, %5 : vector<16x16xf32>
    %10 = arith.select %7, %5, %9 : vector<16x16xi1>, vector<16x16xf32>
    %11 = arith.truncf %10 : vector<16x16xf32> to vector<16x16xbf16>
    %c0_7 = arith.constant 0 : index
    %c0_8 = arith.constant 0 : index
    %12 = vector.load %arg4[%c0_7, %c0_8] : memref<16x16xbf16, #tpu.memory_space<vmem>>, vector<16x16xbf16>
    %cst_9 = arith.constant dense<0.000000e+00> : vector<16x16xf32>
    %13 = tpu.matmul %11, %12, %cst_9 {dimension_numbers = #tpu.dot_dimension_numbers<[1], [0], [0], [1], [0, 0, 1, 1], [], []>} : vector<16x16xbf16>, vector<16x16xbf16>, vector<16x16xf32> -> vector<16x16xf32>
    %c0_10 = arith.constant 0 : index
    %c0_11 = arith.constant 0 : index
    %14 = vector.load %arg5[%c0_10, %c0_11] : memref<1x16xf32, #tpu.memory_space<vmem>>, vector<1x16xf32>
    %15 = vector.broadcast %14 : vector<1x16xf32> to vector<16x16xf32>
    %16 = arith.addf %13, %15 : vector<16x16xf32>
    %cst_12 = arith.constant 0.000000e+00 : f32
    %17 = vector.broadcast %cst_12 : f32 to vector<16x16xf32>
    %18 = arith.cmpf ogt, %16, %17 : vector<16x16xf32>
    %cst_13 = arith.constant 2.000000e-01 : f32
    %19 = vector.broadcast %cst_13 : f32 to vector<16x16xf32>
    %20 = arith.mulf %19, %16 : vector<16x16xf32>
    %21 = arith.select %18, %16, %20 : vector<16x16xi1>, vector<16x16xf32>
    %22 = arith.truncf %21 : vector<16x16xf32> to vector<16x16xbf16>
    %c0_14 = arith.constant 0 : index
    %c0_15 = arith.constant 0 : index
    %23 = vector.load %arg6[%c0_14, %c0_15] : memref<16x128xbf16, #tpu.memory_space<vmem>>, vector<16x128xbf16>
    %cst_16 = arith.constant dense<0.000000e+00> : vector<16x128xf32>
    %24 = tpu.matmul %22, %23, %cst_16 {dimension_numbers = #tpu.dot_dimension_numbers<[1], [0], [0], [1], [0, 0, 1, 1], [], []>} : vector<16x16xbf16>, vector<16x128xbf16>, vector<16x128xf32> -> vector<16x128xf32>
    %c0_17 = arith.constant 0 : index
    %c0_18 = arith.constant 0 : index
    %25 = vector.load %arg7[%c0_17, %c0_18] : memref<1x128xf32, #tpu.memory_space<vmem>>, vector<1x128xf32>
    %26 = vector.broadcast %25 : vector<1x128xf32> to vector<16x128xf32>
    %27 = arith.addf %24, %26 : vector<16x128xf32>
    %c0_19 = arith.constant 0 : index
    %c0_20 = arith.constant 0 : index
    %28 = vector.load %arg8[%c0_19, %c0_20] : memref<16x128xf32, #tpu.memory_space<vmem>>, vector<16x128xf32>
    tpu.vector_store %arg8[%c0_19, %c0_20], %27 {strides = array<i32>} : memref<16x128xf32, #tpu.memory_space<vmem>>, vector<16x128xf32>,
    return
  }
  func.func @transform_0(%arg0: i32) -> (i32, i32) {
    %c0_i32 = arith.constant 0 : i32
    %c0_i32_0 = arith.constant 0 : i32
    return %arg0, %c0_i32 : i32, i32
  }
  func.func @transform_1(%arg0: i32) -> (i32, i32) {
    %c0_i32 = arith.constant 0 : i32
    %c0_i32_0 = arith.constant 0 : i32
    %c0_i32_1 = arith.constant 0 : i32
    return %c0_i32, %c0_i32_0 : i32, i32
  }
  func.func @transform_2(%arg0: i32) -> (i32, i32) {
    %c0_i32 = arith.constant 0 : i32
    %c0_i32_0 = arith.constant 0 : i32
    %c0_i32_1 = arith.constant 0 : i32
    return %c0_i32, %c0_i32_0 : i32, i32
  }
  func.func @transform_3(%arg0: i32) -> (i32, i32) {
    %c0_i32 = arith.constant 0 : i32
    %c0_i32_0 = arith.constant 0 : i32
    %c0_i32_1 = arith.constant 0 : i32
    return %c0_i32, %c0_i32_0 : i32, i32
  }
  func.func @transform_4(%arg0: i32) -> (i32, i32) {
    %c0_i32 = arith.constant 0 : i32
    %c0_i32_0 = arith.constant 0 : i32
    %c0_i32_1 = arith.constant 0 : i32
    return %c0_i32, %c0_i32_0 : i32, i32
  }
  func.func @transform_5(%arg0: i32) -> (i32, i32) {
    %c0_i32 = arith.constant 0 : i32
    %c0_i32_0 = arith.constant 0 : i32
    %c0_i32_1 = arith.constant 0 : i32
    return %c0_i32, %c0_i32_0 : i32, i32
  }
  func.func @transform_6(%arg0: i32) -> (i32, i32) {
    %c0_i32 = arith.constant 0 : i32
    %c0_i32_0 = arith.constant 0 : i32
    %c0_i32_1 = arith.constant 0 : i32
    return %c0_i32, %c0_i32_0 : i32, i32
  }
  func.func @transform_7(%arg0: i32) -> (i32, i32) {
    %c0_i32 = arith.constant 0 : i32
    %c0_i32_0 = arith.constant 0 : i32
    return %arg0, %c0_i32 : i32, i32
  }
}

</mosaic_0001>

<llo_original>
// kernel: tpu_custom_call.1
$region0: #{tpu_custom_call.1}
  #allocation0 [shape = 'u32[]', space=smem, size = 0x4, offset = 0x4, fixed_abs, tag = 'smem constant byte address 0x4 - core index']
  #allocation1 [shape = 'u32[72,128]{1,0:T(1,128)}', space=vmem, size = 0x9000, scoped, tag = 'internal scratch']
  %s0 = inlined_call_operand.vmem [shape: bf16[64,32], index: 0, kind: input, shape index: {}]
  %s1 = inlined_call_operand.vmem [shape: bf16[32,16], index: 1, kind: input, shape index: {}]
  %s2 = inlined_call_operand.vmem [shape: f32[1,16], index: 2, kind: input, shape index: {}]
  %s3 = inlined_call_operand.vmem [shape: bf16[16,16], index: 3, kind: input, shape index: {}]
  %s4 = inlined_call_operand.vmem [shape: f32[1,16], index: 4, kind: input, shape index: {}]
  %s5 = inlined_call_operand.vmem [shape: bf16[16,128], index: 5, kind: input, shape index: {}]
  %s6 = inlined_call_operand.vmem [shape: f32[1,128], index: 6, kind: input, shape index: {}]
  %s7 = inlined_call_operand.hbm [shape: f32[64,128], index: 7, kind: output, shape index: {}]
  %s8 = sld [smem:[#allocation0]]
  $region61: #{tpu_custom_call.1} parent=0
    _
  %s10 = ssub.s32 1, %s8
  %s11 = scalar_select 0, %s10, %s8
  $region1: #{tpu_custom_call.1} parent=0
    #allocation2 [shape = 'u8[16384]{0}', space=vmem, size = 0x4000, scoped, tag = 'output window, operand 0']
    #allocation3 [shape = 's32[2]{0}', space=sflag, size = 0x8, scoped, tag = 'scoped memory for tpu_custom_call.1']
    %12 = vsyncpa [#allocation3], 0
    %s13 = scalar_lea.sflag [#allocation3], 1
    %14 = vsyncpa %s13, 0
    loop: start=0, step=1, limit=6
    $region2: #{tpu_custom_call.1} parent=1 // loop_pre_header
      _
    $region3: #{tpu_custom_call.1} parent=1 // loop_header
      %s16 = sphi 0, %s20
      %p17 = scmp.ge.s32.totalorder %s16, 6
      %s26 = sphi 0, %s28
      %s29 = sphi 0, %s26
      %s30 = sphi 0, %s29
      %s46 = sphi 0, %s30
      %s50 = sphi 0, %s50
      %s52 = sphi 0, %s50
      %s53 = sphi 0, %s52
      %s67 = sphi 0, %s53
      %s71 = sphi 0, %s71
      %s73 = sphi 0, %s71
      %s74 = sphi 0, %s73
      %s88 = sphi 0, %s74
      %s92 = sphi 0, %s92
      %s94 = sphi 0, %s92
      %s95 = sphi 0, %s94
      %s109 = sphi 0, %s95
      %s113 = sphi 0, %s113
      %s115 = sphi 0, %s113
      %s116 = sphi 0, %s115
      %s130 = sphi 0, %s116
      %s134 = sphi 0, %s134
      %s136 = sphi 0, %s134
      %s137 = sphi 0, %s136
      %s151 = sphi 0, %s137
      %s155 = sphi 0, %s155
      %s157 = sphi 0, %s155
      %s158 = sphi 0, %s157
      %s172 = sphi 0, %s158
      %s178 = sphi 0, %s180
      %s181 = sphi 0, %s178
      %s182 = sphi 0, %s181
      %s198 = sphi 0, %s182
    $region4: #{tpu_custom_call.1} parent=1 // loop_header_branch
      %19 = sbr.rel (%p17) target = $region8
    $region5: #{tpu_custom_call.1} parent=1 // loop_body
      %s21 = ssub.s32 %s16, 1
      %s22 = ssub.s32 %s16, 2
      %s23 = sadd.s32 %s16, 1
      %s24 = ssub.s32 %s16, %s23
      %p25 = scmp.eq.s32.totalorder %s24, 0
      %s27 = sadd.s32 %s26, 1
      %s28 = scalar_select %p25, %s26, %s27
      %p31 = pneg %p25
      %p32 = scmp.eq.s32.totalorder %s16, 3
      %p33 = por %p31, %p32
      %p34 = scmp.ne.s32.totalorder %s26, %s29
      %p35 = scmp.eq.s32.totalorder %s16, 0
      %p36 = por %p34, %p35
      %p37 = scmp.ne.s32.totalorder %s26, %s29
      %p38 = scmp.eq.s32.totalorder %s21, 3
      %p39 = por %p37, %p38
      %p40 = scmp.ne.s32.totalorder %s29, %s30
      %p41 = scmp.eq.s32.totalorder %s21, 0
      %p42 = por %p40, %p41
      %p43 = scmp.ne.s32.totalorder %s29, %s30
      %p44 = scmp.eq.s32.totalorder %s22, 3
      %p45 = por %p43, %p44
      %p47 = scmp.ne.s32.totalorder %s30, %s46
      %p48 = scmp.eq.s32.totalorder %s22, 0
      %p49 = por %p47, %p48
      %s51 = sadd.s32 %s50, 1
      %p54 = scmp.eq.s32.totalorder %s16, 3
      %p55 = scmp.ne.s32.totalorder %s50, %s52
      %p56 = scmp.eq.s32.totalorder %s16, 0
      %p57 = por %p55, %p56
      %p58 = scmp.ne.s32.totalorder %s50, %s52
      %p59 = scmp.eq.s32.totalorder %s21, 3
      %p60 = por %p58, %p59
      %p61 = scmp.ne.s32.totalorder %s52, %s53
      %p62 = scmp.eq.s32.totalorder %s21, 0
      %p63 = por %p61, %p62
      %p64 = scmp.ne.s32.totalorder %s52, %s53
      %p65 = scmp.eq.s32.totalorder %s22, 3
      %p66 = por %p64, %p65
      %p68 = scmp.ne.s32.totalorder %s53, %s67
      %p69 = scmp.eq.s32.totalorder %s22, 0
      %p70 = por %p68, %p69
      %s72 = sadd.s32 %s71, 1
      %p75 = scmp.eq.s32.totalorder %s16, 3
      %p76 = scmp.ne.s32.totalorder %s71, %s73
      %p77 = scmp.eq.s32.totalorder %s16, 0
      %p78 = por %p76, %p77
      %p79 = scmp.ne.s32.totalorder %s71, %s73
      %p80 = scmp.eq.s32.totalorder %s21, 3
      %p81 = por %p79, %p80
      %p82 = scmp.ne.s32.totalorder %s73, %s74
      %p83 = scmp.eq.s32.totalorder %s21, 0
      %p84 = por %p82, %p83
      %p85 = scmp.ne.s32.totalorder %s73, %s74
      %p86 = scmp.eq.s32.totalorder %s22, 3
      %p87 = por %p85, %p86
      %p89 = scmp.ne.s32.totalorder %s74, %s88
      %p90 = scmp.eq.s32.totalorder %s22, 0
      %p91 = por %p89, %p90
      %s93 = sadd.s32 %s92, 1
      %p96 = scmp.eq.s32.totalorder %s16, 3
      %p97 = scmp.ne.s32.totalorder %s92, %s94
      %p98 = scmp.eq.s32.totalorder %s16, 0
      %p99 = por %p97, %p98
      %p100 = scmp.ne.s32.totalorder %s92, %s94
      %p101 = scmp.eq.s32.totalorder %s21, 3
      %p102 = por %p100, %p101
      %p103 = scmp.ne.s32.totalorder %s94, %s95
      %p104 = scmp.eq.s32.totalorder %s21, 0
      %p105 = por %p103, %p104
      %p106 = scmp.ne.s32.totalorder %s94, %s95
      %p107 = scmp.eq.s32.totalorder %s22, 3
      %p108 = por %p106, %p107
      %p110 = scmp.ne.s32.totalorder %s95, %s109
      %p111 = scmp.eq.s32.totalorder %s22, 0
      %p112 = por %p110, %p111
      %s114 = sadd.s32 %s113, 1
      %p117 = scmp.eq.s32.totalorder %s16, 3
      %p118 = scmp.ne.s32.totalorder %s113, %s115
      %p119 = scmp.eq.s32.totalorder %s16, 0
      %p120 = por %p118, %p119
      %p121 = scmp.ne.s32.totalorder %s113, %s115
      %p122 = scmp.eq.s32.totalorder %s21, 3
      %p123 = por %p121, %p122
      %p124 = scmp.ne.s32.totalorder %s115, %s116
      %p125 = scmp.eq.s32.totalorder %s21, 0
      %p126 = por %p124, %p125
      %p127 = scmp.ne.s32.totalorder %s115, %s116
      %p128 = scmp.eq.s32.totalorder %s22, 3
      %p129 = por %p127, %p128
      %p131 = scmp.ne.s32.totalorder %s116, %s130
      %p132 = scmp.eq.s32.totalorder %s22, 0
      %p133 = por %p131, %p132
      %s135 = sadd.s32 %s134, 1
      %p138 = scmp.eq.s32.totalorder %s16, 3
      %p139 = scmp.ne.s32.totalorder %s134, %s136
      %p140 = scmp.eq.s32.totalorder %s16, 0
      %p141 = por %p139, %p140
      %p142 = scmp.ne.s32.totalorder %s134, %s136
      %p143 = scmp.eq.s32.totalorder %s21, 3
      %p144 = por %p142, %p143
      %p145 = scmp.ne.s32.totalorder %s136, %s137
      %p146 = scmp.eq.s32.totalorder %s21, 0
      %p147 = por %p145, %p146
      %p148 = scmp.ne.s32.totalorder %s136, %s137
      %p149 = scmp.eq.s32.totalorder %s22, 3
      %p150 = por %p148, %p149
      %p152 = scmp.ne.s32.totalorder %s137, %s151
      %p153 = scmp.eq.s32.totalorder %s22, 0
      %p154 = por %p152, %p153
      %s156 = sadd.s32 %s155, 1
      %p159 = scmp.eq.s32.totalorder %s16, 3
      %p160 = scmp.ne.s32.totalorder %s155, %s157
      %p161 = scmp.eq.s32.totalorder %s16, 0
      %p162 = por %p160, %p161
      %p163 = scmp.ne.s32.totalorder %s155, %s157
      %p164 = scmp.eq.s32.totalorder %s21, 3
      %p165 = por %p163, %p164
      %p166 = scmp.ne.s32.totalorder %s157, %s158
      %p167 = scmp.eq.s32.totalorder %s21, 0
      %p168 = por %p166, %p167
      %p169 = scmp.ne.s32.totalorder %s157, %s158
      %p170 = scmp.eq.s32.totalorder %s22, 3
      %p171 = por %p169, %p170
      %p173 = scmp.ne.s32.totalorder %s158, %s172
      %p174 = scmp.eq.s32.totalorder %s22, 0
      %p175 = por %p173, %p174
      %s176 = ssub.s32 %s16, %s23
      %p177 = scmp.eq.s32.totalorder %s176, 0
      %s179 = sadd.s32 %s178, 1
      %s180 = scalar_select %p177, %s178, %s179
      %p183 = pneg %p177
      %p184 = scmp.eq.s32.totalorder %s16, 3
      %p185 = por %p183, %p184
      %p186 = scmp.ne.s32.totalorder %s178, %s181
      %p187 = scmp.eq.s32.totalorder %s16, 0
      %p188 = por %p186, %p187
      %p189 = scmp.ne.s32.totalorder %s178, %s181
      %p190 = scmp.eq.s32.totalorder %s21, 3
      %p191 = por %p189, %p190
      %p192 = scmp.ne.s32.totalorder %s181, %s182
      %p193 = scmp.eq.s32.totalorder %s21, 0
      %p194 = por %p192, %p193
      %p195 = scmp.ne.s32.totalorder %s181, %s182
      %p196 = scmp.eq.s32.totalorder %s22, 3
      %p197 = por %p195, %p196
      %p199 = scmp.ne.s32.totalorder %s182, %s198
      %p200 = scmp.eq.s32.totalorder %s22, 0
      %p201 = por %p199, %p200
      %p202 = scmp.le.s32.totalorder 1, %s16
      %p203 = scmp.lt.s32.totalorder %s16, 5
      %p204 = pnand %p202, %p203
      %p205 = pneg %p204
      // Predicated region
      $region9: #{tpu_custom_call.1} parent=5 // pred_check
        _
      $region10: #{tpu_custom_call.1} parent=5 // pred_check_branch
        %207 = sbr.rel (%p204) target = $region12
      $region11: #{tpu_custom_call.1} parent=5 // pred_region
        %s208 = ssub.s32 %s16, 1
        // Predicated region
        $region13: #{tpu_custom_call.1} parent=11 // pred_check
          %p209 = pneg %p63
        $region14: #{tpu_custom_call.1} parent=11 // pred_check_branch
          %211 = sbr.rel (%p209) target = $region16
        $region15: #{tpu_custom_call.1} parent=11 // pred_region
          _
        $region16: #{tpu_custom_call.1} parent=11 // pred_fallthru
          _
        // Predicated region
        $region17: #{tpu_custom_call.1} parent=11 // pred_check
          %p212 = pneg %p84
        $region18: #{tpu_custom_call.1} parent=11 // pred_check_branch
          %214 = sbr.rel (%p212) target = $region20
        $region19: #{tpu_custom_call.1} parent=11 // pred_region
          _
        $region20: #{tpu_custom_call.1} parent=11 // pred_fallthru
          _
        // Predicated region
        $region21: #{tpu_custom_call.1} parent=11 // pred_check
          %p215 = pneg %p105
        $region22: #{tpu_custom_call.1} parent=11 // pred_check_branch
          %217 = sbr.rel (%p215) target = $region24
        $region23: #{tpu_custom_call.1} parent=11 // pred_region
          _
        $region24: #{tpu_custom_call.1} parent=11 // pred_fallthru
          _
        // Predicated region
        $region25: #{tpu_custom_call.1} parent=11 // pred_check
          %p218 = pneg %p126
        $region26: #{tpu_custom_call.1} parent=11 // pred_check_branch
          %220 = sbr.rel (%p218) target = $region28
        $region27: #{tpu_custom_call.1} parent=11 // pred_region
          _
        $region28: #{tpu_custom_call.1} parent=11 // pred_fallthru
          _
        // Predicated region
        $region29: #{tpu_custom_call.1} parent=11 // pred_check
          %p221 = pneg %p147
        $region30: #{tpu_custom_call.1} parent=11 // pred_check_branch
          %223 = sbr.rel (%p221) target = $region32
        $region31: #{tpu_custom_call.1} parent=11 // pred_region
          _
        $region32: #{tpu_custom_call.1} parent=11 // pred_fallthru
          _
        // Predicated region
        $region33: #{tpu_custom_call.1} parent=11 // pred_check
          %p224 = pneg %p168
        $region34: #{tpu_custom_call.1} parent=11 // pred_check_branch
          %226 = sbr.rel (%p224) target = $region36
        $region35: #{tpu_custom_call.1} parent=11 // pred_region
          _
        $region36: #{tpu_custom_call.1} parent=11 // pred_fallthru
          _
      $region12: #{tpu_custom_call.1} parent=5 // pred_fallthru
        _
      %p227 = scmp.lt.s32.totalorder %s16, 4
      // Predicated region
      $region37: #{tpu_custom_call.1} parent=5 // pred_check
        %p228 = pneg %p227
      $region38: #{tpu_custom_call.1} parent=5 // pred_check_branch
        %230 = sbr.rel (%p228) target = $region40
      $region39: #{tpu_custom_call.1} parent=5 // pred_region
        // Predicated region
        $region41: #{tpu_custom_call.1} parent=39 // pred_check
          %p231 = pneg %p36
        $region42: #{tpu_custom_call.1} parent=39 // pred_check_branch
          %233 = sbr.rel (%p231) target = $region44
        $region43: #{tpu_custom_call.1} parent=39 // pred_region
          %s234 = smul.u32 2, %s16
          %p235 = scmp.lt.s32.totalorder %s234, 7
          %s236 = scalar_select %p235, %s234, 7
          %s237 = smul.addr %s236, 4
          %s238 = scalar_lea.vmem %s0, %s237
          %s239 = smul.u32 2, %s16
        $region44: #{tpu_custom_call.1} parent=39 // pred_fallthru
          _
      $region40: #{tpu_custom_call.1} parent=5 // pred_fallthru
        _
      %p240 = scmp.le.s32.totalorder 1, %s16
      %p241 = scmp.lt.s32.totalorder %s16, 5
      %p242 = pnand %p240, %p241
      %p243 = pneg %p242
      // Predicated region
      $region45: #{tpu_custom_call.1} parent=5 // pred_check
        _
      $region46: #{tpu_custom_call.1} parent=5 // pred_check_branch
        %245 = sbr.rel (%p242) target = $region48
      $region47: #{tpu_custom_call.1} parent=5 // pred_region
        %s246 = ssub.s32 %s16, 1
        %s247 = smul.u32 2, %s21
        %p248 = scmp.lt.s32.totalorder %s247, 7
        %s249 = scalar_select %p248, %s247, 7
        %s250 = smul.addr %s249, 4
        %s251 = scalar_lea.vmem %s0, %s250
        %p252 = pneg %p42
        %p253 = pneg %p39
        %p254 = pneg %p63
        %p255 = pneg %p60
        %p256 = pneg %p84
        %p257 = pneg %p81
        %p258 = pneg %p105
        %p259 = pneg %p102
        %p260 = pneg %p126
        %p261 = pneg %p123
        %p262 = pneg %p147
        %p263 = pneg %p144
        %p264 = pneg %p168
        %p265 = pneg %p165
        %p266 = pneg %p194
        %p267 = pneg %p191
        %s268 = sand.u32 %s181, 1
        %s269 = scalar_lea.sflag [#allocation3], %s268
        %s270 = sand.u32 %s181, 1
        %s271 = smul.addr %s270, 16
        %s272 = scalar_lea.vmem [#allocation2], %s271
        %s273 = smul.u32 2, %s21
        %p274 = scmp.lt.s32.totalorder %s273, 7
        %s275 = scalar_select %p274, %s273, 7
        %s276 = smul.addr %s275, 4
        %s277 = scalar_lea.vmem %s0, %s276
        %s278 = smul.u32 2, %s21
        %s279 = smul.u32 2, %s21
        %v281 = vld [vmem:[%s277] sm:$0xf]
        %v282 = vld [vmem:[%s277 + $0x4] sm:$0xf]
        %v283 = vld [vmem:[%s1] sm:$0xf]
        %v284 = vld [vmem:[%s1 + $0x4] sm:$0xf]
        %v285 = vld [vmem:[%s1 + $0x8] sm:$0xf]
        %v286 = vld [vmem:[%s1 + $0xc] sm:$0xf]
        %v287 = vld [vmem:[%s2] sm:$0x1]
        %v289 = vperm.slane %v287, 0
        %v293 = vunpack.c.l.b16 %v281
        %v294 = vunpack.c.l.b16 %v282
        %v295 = vpack.c.b16 %v294, %v293
        %v300 = vunpack.c.l.b16 %v283
        %v301 = vunpack.c.l.b16 %v284
        %v302 = vunpack.c.l.b16 %v285
        %v303 = vunpack.c.l.b16 %v286
        %v304 = vpack.c.b16 %v301, %v300
        %v305 = vpack.c.b16 %v303, %v302
        %vm308 = vcmask 261120
        %v310 = vsel %vm308, %v295, 0
        %312 = vmatpush.bf16.msra.mxu0 0
        %313 = vmatpush.bf16.msra.mxu0 0
        %314 = vmatpush.bf16.msra.mxu0 0
        %315 = vmatpush.bf16.msra.mxu0 0
        %316 = vmatpush.bf16.msra.mxu0 0
        %317 = vmatpush.bf16.msra.mxu0 0
        %318 = vmatpush.bf16.msra.mxu0 %v305
        %319 = vmatpush.bf16.msra.mxu0 %v304
        %320 = vmatmul.bf16.gmra.mxu0 %v310
        %v321 = vpop.f32.mrf.mxu0
        %v322 = vadd.f32 %v289, %v321
        %v323 = vpop.f32.mrf.mxu0
        %v324 = vadd.f32 %v289, %v323
        %325 = vdwg.mxu0
        %vm326 = vcmp.gt.f32.partialorder %v322, 0.0
        %vm327 = vcmp.gt.f32.partialorder %v324, 0.0
        %v328 = vmul.f32 %v322, 0.2
        %v329 = vmul.f32 %v324, 0.2
        %v330 = vsel %vm326, %v322, %v328
        %v331 = vsel %vm327, %v324, %v329
        %v332 = vpack.c.bf16 %v331, %v330
        %v333 = vld [vmem:[%s3] sm:$0xf]
        %v334 = vld [vmem:[%s3 + $0x4] sm:$0xf]
        %v335 = vld [vmem:[%s4] sm:$0x1]
        %v337 = vperm.slane %v335, 0
        %v341 = vunpack.c.l.b16 %v333
        %v342 = vunpack.c.l.b16 %v334
        %v343 = vpack.c.b16 %v342, %v341
        %vm345 = vcmask 130048
        %v347 = vsel %vm345, %v332, 0
        %349 = vmatpush.bf16.msra.mxu0 0
        %350 = vmatpush.bf16.msra.mxu0 0
        %351 = vmatpush.bf16.msra.mxu0 0
        %352 = vmatpush.bf16.msra.mxu0 0
        %353 = vmatpush.bf16.msra.mxu0 0
        %354 = vmatpush.bf16.msra.mxu0 0
        %355 = vmatpush.bf16.msra.mxu0 0
        %356 = vmatpush.bf16.msra.mxu0 %v343
        %357 = vmatmul.bf16.gmra.mxu0 %v347
        %v358 = vpop.f32.mrf.mxu0
        %v359 = vadd.f32 %v337, %v358
        %v360 = vpop.f32.mrf.mxu0
        %v361 = vadd.f32 %v337, %v360
        %362 = vdwg.mxu0
        %vm363 = vcmp.gt.f32.partialorder %v359, 0.0
        %vm364 = vcmp.gt.f32.partialorder %v361, 0.0
        %v365 = vmul.f32 %v359, 0.2
        %v366 = vmul.f32 %v361, 0.2
        %v367 = vsel %vm363, %v359, %v365
        %v368 = vsel %vm364, %v361, %v366
        %v369 = vpack.c.bf16 %v368, %v367
        %v370 = vld [vmem:[%s5] sm:$0xf]
        %v371 = vld [vmem:[%s5 + $0x4] sm:$0xf]
        %v372 = vld [vmem:[%s6] sm:$0x1]
        %v374 = vperm.slane %v372, 0
        %v378 = vunpack.c.l.b16 %v370
        %v379 = vunpack.c.l.b16 %v371
        %v380 = vpack.c.b16 %v379, %v378
        %v383 = vsel %vm345, %v369, 0
        %385 = vmatpush.bf16.msra.mxu0 0
        %386 = vmatpush.bf16.msra.mxu0 0
        %387 = vmatpush.bf16.msra.mxu0 0
        %388 = vmatpush.bf16.msra.mxu0 0
        %389 = vmatpush.bf16.msra.mxu0 0
        %390 = vmatpush.bf16.msra.mxu0 0
        %391 = vmatpush.bf16.msra.mxu0 0
        %392 = vmatpush.bf16.msra.mxu0 %v380
        %393 = vmatmul.bf16.gmra.mxu0 %v383
        %v394 = vpop.f32.mrf.mxu0
        %v395 = vadd.f32 %v374, %v394
        %v396 = vpop.f32.mrf.mxu0
        %v397 = vadd.f32 %v374, %v396
        %398 = vdwg.mxu0
        %399 = vst [vmem:[%s272] sm:$0xff] %v395
        %400 = vst [vmem:[%s272 + $0x8] sm:$0xff] %v397
        %s401 = sand.u32 %s181, 1
        %s402 = scalar_lea.sflag [#allocation3], %s401
        %s403 = sand.u32 %s181, 1
        %s404 = smul.addr %s403, 16
        %s405 = scalar_lea.vmem [#allocation2], %s404
        // Predicated region
        $region49: #{tpu_custom_call.1} parent=47 // pred_check
          %p406 = pneg %p191
        $region50: #{tpu_custom_call.1} parent=47 // pred_check_branch
          %408 = sbr.rel (%p406) target = $region52
        $region51: #{tpu_custom_call.1} parent=47 // pred_region
          %s409 = smul.u32 2, %s21
          %411 = vsyncadd %s402, 0
          %s412 = smul.addr %s409, 8
          %s413 = scalar_lea.hbm %s7, %s412
          %s414 = sshll.u32 %s405, 4
          %s415 = int_to_ptr.vmem [resolvable:$true] %s414
          %s416 = sshll.u32 %s413, 4
          %s417 = int_to_ptr.hbm [resolvable:$true] %s416
          %422 = dma.vmem_to_hbm [thread:$0]  %s415, 256, %s417, %s402, 128, 128, 8
        $region52: #{tpu_custom_call.1} parent=47 // pred_fallthru
          _
      $region48: #{tpu_custom_call.1} parent=5 // pred_fallthru
        _
      %p423 = scmp.le.s32.totalorder 2, %s16
      // Predicated region
      $region53: #{tpu_custom_call.1} parent=5 // pred_check
        %p424 = pneg %p423
      $region54: #{tpu_custom_call.1} parent=5 // pred_check_branch
        %426 = sbr.rel (%p424) target = $region56
      $region55: #{tpu_custom_call.1} parent=5 // pred_region
        %s427 = ssub.s32 %s16, 2
        // Predicated region
        $region57: #{tpu_custom_call.1} parent=55 // pred_check
          %p428 = pneg %p197
        $region58: #{tpu_custom_call.1} parent=55 // pred_check_branch
          %430 = sbr.rel (%p428) target = $region60
        $region59: #{tpu_custom_call.1} parent=55 // pred_region
          %s431 = sand.u32 %s182, 1
          %s432 = scalar_lea.sflag [#allocation3], %s431
          %s433 = sand.u32 %s182, 1
          %s434 = smul.addr %s433, 16
          %s435 = scalar_lea.vmem [#allocation2], %s434
          %437 = dma.done %s432, 256
        $region60: #{tpu_custom_call.1} parent=55 // pred_fallthru
          _
      $region56: #{tpu_custom_call.1} parent=5 // pred_fallthru
        _
    $region6: #{tpu_custom_call.1} parent=1 // loop_footer
      %s20 = sadd.s32 1, %s16
    $region7: #{tpu_custom_call.1} parent=1 // loop_footer_branch
      %15 = sbr.rel target = $region3
    $region8: #{tpu_custom_call.1} parent=1 // loop_exit
      _
    %438 = vsyncpa [#allocation3], 1
    %s439 = scalar_lea.sflag [#allocation3], 1
    %440 = vsyncpa %s439, 1

</llo_original>
